<compile_context>
chip_gen: v7x
topology: tpu7x:2x2x1
jax: 0.10.0
libtpu: 0.0.40
codegen_flags: <defaults>
</compile_context>

<pallas_src>
import jax
import jax.numpy as jnp
from jax.experimental import pallas as pl
from jax.experimental.pallas import tpu as pltpu


NUM_ACTIONS = 2     # CartPole: push left / push right
IN_FEATURES = 4     # CartPole observation dim
HIDDEN = 256
OUT_PAD = 128       # lane-dense padded fc2 output width (>= NUM_ACTIONS)


def _round_up(x, m):
    return (x + m - 1) // m * m


def dqn_kernel(x_ref, w1_ref, b1_ref, w2_ref, b2_ref, o_ref):
    x = x_ref[...]                     # [TB, 4]   f32
    w1 = w1_ref[...]                   # [4, 256]  f32
    # fc1: K=4 contraction wastes the MXU -> 4 broadcast FMAs on the VPU.
    h = x[:, 0:1] * w1[0:1, :]
    for k in range(1, IN_FEATURES):
        h = h + x[:, k:k + 1] * w1[k:k + 1, :]
    h = h + b1_ref[...]                # f32 bias add (keep f32 for v5e VPU)
    h = jnp.maximum(h, 0.0)            # f32 ReLU
    # fc2: [TB, 256] @ [256, 128] on the MXU, bf16 inputs, f32 accumulation.
    out = jnp.dot(h.astype(jnp.bfloat16), w2_ref[...],
                  preferred_element_type=jnp.float32)
    out = out + b2_ref[...]            # f32 bias add on padded lanes
    o_ref[...] = out.astype(o_ref.dtype)


def dqn_forward(x, w1, b1, w2, b2, *, block_b=1024):
    """Pallas forward pass.

    Args:
      x:  [B, 4]   float32
      w1: [4, 256] float32   (fc1 weight, transposed to [in, out])
      b1: [256]    float32
      w2: [256, A] float32   (fc2 weight, transposed to [in, out])
      b2: [A]      float32
      block_b: max batch tile size (multiple of 8).
    Returns:
      [B, A] float32 Q-values.
    """
    assert block_b % 8 == 0
    B = x.shape[0]
    A = w2.shape[1]
    assert A <= OUT_PAD

    # Lane-dense padded fc2 params; bf16 weights for the MXU path.
    w2_pad = jnp.pad(w2, ((0, 0), (0, OUT_PAD - A))).astype(jnp.bfloat16)
    b2_pad = jnp.pad(b2, (0, OUT_PAD - A)).reshape(1, OUT_PAD).astype(jnp.float32)
    b1_2d = b1.reshape(1, HIDDEN).astype(jnp.float32)
    w1_f32 = w1.astype(jnp.float32)

    # Batch tiling: tile is a multiple of 8; pad B up to a multiple of the tile.
    tb = min(block_b, _round_up(B, 8))
    b_pad = _round_up(B, tb)
    x_pad = x.astype(jnp.float32)
    if b_pad != B:
        x_pad = jnp.pad(x_pad, ((0, b_pad - B), (0, 0)))

    grid = (b_pad // tb,)

    flops = 2 * B * IN_FEATURES * HIDDEN + 2 * B * HIDDEN * OUT_PAD
    bytes_accessed = (x_pad.size * 4 + w1_f32.size * 4 + b1_2d.size * 4
                      + w2_pad.size * 2 + b2_pad.size * 4 + b_pad * OUT_PAD * 4)

    out_padded = pl.pallas_call(
        dqn_kernel,
        out_shape=jax.ShapeDtypeStruct((b_pad, OUT_PAD), jnp.float32),
        grid=grid,
        in_specs=[
            pl.BlockSpec((tb, IN_FEATURES), lambda i: (i, 0)),   # x: batch-tiled
            pl.BlockSpec((IN_FEATURES, HIDDEN), lambda i: (0, 0)),  # w1 resident
            pl.BlockSpec((1, HIDDEN), lambda i: (0, 0)),            # b1 resident
            pl.BlockSpec((HIDDEN, OUT_PAD), lambda i: (0, 0)),      # w2 resident
            pl.BlockSpec((1, OUT_PAD), lambda i: (0, 0)),           # b2 resident
        ],
        out_specs=pl.BlockSpec((tb, OUT_PAD), lambda i: (i, 0)),
        compiler_params=pltpu.CompilerParams(
            dimension_semantics=("parallel",)),
        cost_estimate=pl.CostEstimate(
            flops=flops, transcendentals=0, bytes_accessed=bytes_accessed),
    )(x_pad, w1_f32, b1_2d, w2_pad, b2_pad)

    return out_padded[:B, :A]


def init_params(key):
    """Deterministic init mimicking torch.nn.Linear default (uniform +-1/sqrt(fan_in))."""
    k1, k2, k3, k4 = jax.random.split(key, 4)
    bound1 = 1.0 / jnp.sqrt(IN_FEATURES)
    bound2 = 1.0 / jnp.sqrt(HIDDEN)
    # Stored directly in [in, out] layout (== torch weight transposed).
    w1 = jax.random.uniform(k1, (IN_FEATURES, HIDDEN), jnp.float32, -bound1, bound1)
    b1 = jax.random.uniform(k2, (HIDDEN,), jnp.float32, -bound1, bound1)
    w2 = jax.random.uniform(k3, (HIDDEN, NUM_ACTIONS), jnp.float32, -bound2, bound2)
    b2 = jax.random.uniform(k4, (NUM_ACTIONS,), jnp.float32, -bound2, bound2)
    return w1, b1, w2, b2


def _reference(x, w1, b1, w2, b2):
    return jnp.maximum(x @ w1 + b1, 0.0) @ w2 + b2


if __name__ == "__main__":
    key = jax.random.PRNGKey(0)
    kx, kx2, kp = jax.random.split(key, 3)
    w1, b1, w2, b2 = init_params(kp)

    # Test 1: small single-tile batch (typical act() path).
    batch = 8
    x = jax.random.normal(kx, (batch, IN_FEATURES), jnp.float32)
    q = jax.block_until_ready(dqn_forward(x, w1, b1, w2, b2))
    ref = _reference(x, w1, b1, w2, b2)
    assert q.shape == (batch, NUM_ACTIONS)
    assert jnp.allclose(q, ref, atol=2e-2, rtol=2e-2)   # bf16 fc2 inputs

    # Test 2: ragged batch with a multi-step grid (exercises batch tiling,
    # resident weights, and padded-tail slicing).
    batch2 = 37
    x2 = jax.random.normal(kx2, (batch2, IN_FEATURES), jnp.float32)
    q2 = jax.block_until_ready(dqn_forward(x2, w1, b1, w2, b2, block_b=16))
    ref2 = _reference(x2, w1, b1, w2, b2)
    assert q2.shape == (batch2, NUM_ACTIONS)
    assert jnp.allclose(q2, ref2, atol=2e-2, rtol=2e-2)

    print("KERNEL_OK")
</pallas_src>

<mosaic_0001>
module attributes {stable_mosaic.version = 11 : i64} {
  func.func @dqn_kernel(%arg0: i32, %arg1: memref<8x4xf32, #tpu.memory_space<vmem>>, %arg2: memref<4x256xf32, #tpu.memory_space<vmem>>, %arg3: memref<1x256xf32, #tpu.memory_space<vmem>>, %arg4: memref<256x128xbf16, #tpu.memory_space<vmem>>, %arg5: memref<1x128xf32, #tpu.memory_space<vmem>>, %arg6: memref<8x128xf32, #tpu.memory_space<vmem>>) attributes {dimension_semantics = [#tpu.dimension_semantics<parallel>], iteration_bounds = array<i64: 1>, scalar_prefetch = 0 : i64, scratch_operands = 0 : i64, tpu.core_type = #tpu.core_type<tc>, window_params = [{transform_indices = @transform_0, window_bounds = array<i64: 8, 4>}, {pipeline_mode = #tpu.pipeline_mode<synchronous>, transform_indices = @transform_1, window_bounds = array<i64: 4, 256>}, {pipeline_mode = #tpu.pipeline_mode<synchronous>, transform_indices = @transform_2, window_bounds = array<i64: 1, 256>}, {pipeline_mode = #tpu.pipeline_mode<synchronous>, transform_indices = @transform_3, window_bounds = array<i64: 256, 128>}, {pipeline_mode = #tpu.pipeline_mode<synchronous>, transform_indices = @transform_4, window_bounds = array<i64: 1, 128>}, {transform_indices = @transform_5, window_bounds = array<i64: 8, 128>}]} {
    %c0 = arith.constant 0 : index
    %c0_0 = arith.constant 0 : index
    %0 = vector.load %arg1[%c0, %c0_0] : memref<8x4xf32, #tpu.memory_space<vmem>>, vector<8x4xf32>
    %c0_1 = arith.constant 0 : index
    %c0_2 = arith.constant 0 : index
    %1 = vector.load %arg2[%c0_1, %c0_2] : memref<4x256xf32, #tpu.memory_space<vmem>>, vector<4x256xf32>
    %2 = vector.extract_strided_slice %0 {offsets = [0, 0], sizes = [8, 1], strides = [1, 1]} : vector<8x4xf32> to vector<8x1xf32>
    %3 = vector.extract_strided_slice %1 {offsets = [0, 0], sizes = [1, 256], strides = [1, 1]} : vector<4x256xf32> to vector<1x256xf32>
    %4 = vector.broadcast %2 : vector<8x1xf32> to vector<8x256xf32>
    %5 = vector.broadcast %3 : vector<1x256xf32> to vector<8x256xf32>
    %6 = arith.mulf %4, %5 : vector<8x256xf32>
    %7 = vector.extract_strided_slice %0 {offsets = [0, 1], sizes = [8, 1], strides = [1, 1]} : vector<8x4xf32> to vector<8x1xf32>
    %8 = vector.extract_strided_slice %1 {offsets = [1, 0], sizes = [1, 256], strides = [1, 1]} : vector<4x256xf32> to vector<1x256xf32>
    %9 = vector.broadcast %7 : vector<8x1xf32> to vector<8x256xf32>
    %10 = vector.broadcast %8 : vector<1x256xf32> to vector<8x256xf32>
    %11 = arith.mulf %9, %10 : vector<8x256xf32>
    %12 = arith.addf %6, %11 : vector<8x256xf32>
    %13 = vector.extract_strided_slice %0 {offsets = [0, 2], sizes = [8, 1], strides = [1, 1]} : vector<8x4xf32> to vector<8x1xf32>
    %14 = vector.extract_strided_slice %1 {offsets = [2, 0], sizes = [1, 256], strides = [1, 1]} : vector<4x256xf32> to vector<1x256xf32>
    %15 = vector.broadcast %13 : vector<8x1xf32> to vector<8x256xf32>
    %16 = vector.broadcast %14 : vector<1x256xf32> to vector<8x256xf32>
    %17 = arith.mulf %15, %16 : vector<8x256xf32>
    %18 = arith.addf %12, %17 : vector<8x256xf32>
    %19 = vector.extract_strided_slice %0 {offsets = [0, 3], sizes = [8, 1], strides = [1, 1]} : vector<8x4xf32> to vector<8x1xf32>
    %20 = vector.extract_strided_slice %1 {offsets = [3, 0], sizes = [1, 256], strides = [1, 1]} : vector<4x256xf32> to vector<1x256xf32>
    %21 = vector.broadcast %19 : vector<8x1xf32> to vector<8x256xf32>
    %22 = vector.broadcast %20 : vector<1x256xf32> to vector<8x256xf32>
    %23 = arith.mulf %21, %22 : vector<8x256xf32>
    %24 = arith.addf %18, %23 : vector<8x256xf32>
    %c0_3 = arith.constant 0 : index
    %c0_4 = arith.constant 0 : index
    %25 = vector.load %arg3[%c0_3, %c0_4] : memref<1x256xf32, #tpu.memory_space<vmem>>, vector<1x256xf32>
    %26 = vector.broadcast %25 : vector<1x256xf32> to vector<8x256xf32>
    %27 = arith.addf %24, %26 : vector<8x256xf32>
    %cst = arith.constant 0.000000e+00 : f32
    %28 = vector.broadcast %cst : f32 to vector<8x256xf32>
    %29 = arith.maximumf %27, %28 : vector<8x256xf32>
    %30 = arith.truncf %29 : vector<8x256xf32> to vector<8x256xbf16>
    %c0_5 = arith.constant 0 : index
    %c0_6 = arith.constant 0 : index
    %31 = vector.load %arg4[%c0_5, %c0_6] : memref<256x128xbf16, #tpu.memory_space<vmem>>, vector<256x128xbf16>
    %cst_7 = arith.constant dense<0.000000e+00> : vector<8x128xf32>
    %32 = tpu.matmul %30, %31, %cst_7 {dimension_numbers = #tpu.dot_dimension_numbers<[1], [0], [0], [1], [0, 0, 1, 1], [], []>} : vector<8x256xbf16>, vector<256x128xbf16>, vector<8x128xf32> -> vector<8x128xf32>
    %c0_8 = arith.constant 0 : index
    %c0_9 = arith.constant 0 : index
    %33 = vector.load %arg5[%c0_8, %c0_9] : memref<1x128xf32, #tpu.memory_space<vmem>>, vector<1x128xf32>
    %34 = vector.broadcast %33 : vector<1x128xf32> to vector<8x128xf32>
    %35 = arith.addf %32, %34 : vector<8x128xf32>
    %c0_10 = arith.constant 0 : index
    %c0_11 = arith.constant 0 : index
    %36 = vector.load %arg6[%c0_10, %c0_11] : memref<8x128xf32, #tpu.memory_space<vmem>>, vector<8x128xf32>
    tpu.vector_store %arg6[%c0_10, %c0_11], %35 {strides = array<i32>} : memref<8x128xf32, #tpu.memory_space<vmem>>, vector<8x128xf32>,
    return
  }
  func.func @transform_0(%arg0: i32) -> (i32, i32) {
    %c0_i32 = arith.constant 0 : i32
    %c0_i32_0 = arith.constant 0 : i32
    return %arg0, %c0_i32 : i32, i32
  }
  func.func @transform_1(%arg0: i32) -> (i32, i32) {
    %c0_i32 = arith.constant 0 : i32
    %c0_i32_0 = arith.constant 0 : i32
    %c0_i32_1 = arith.constant 0 : i32
    return %c0_i32, %c0_i32_0 : i32, i32
  }
  func.func @transform_2(%arg0: i32) -> (i32, i32) {
    %c0_i32 = arith.constant 0 : i32
    %c0_i32_0 = arith.constant 0 : i32
    %c0_i32_1 = arith.constant 0 : i32
    return %c0_i32, %c0_i32_0 : i32, i32
  }
  func.func @transform_3(%arg0: i32) -> (i32, i32) {
    %c0_i32 = arith.constant 0 : i32
    %c0_i32_0 = arith.constant 0 : i32
    %c0_i32_1 = arith.constant 0 : i32
    return %c0_i32, %c0_i32_0 : i32, i32
  }
  func.func @transform_4(%arg0: i32) -> (i32, i32) {
    %c0_i32 = arith.constant 0 : i32
    %c0_i32_0 = arith.constant 0 : i32
    %c0_i32_1 = arith.constant 0 : i32
    return %c0_i32, %c0_i32_0 : i32, i32
  }
  func.func @transform_5(%arg0: i32) -> (i32, i32) {
    %c0_i32 = arith.constant 0 : i32
    %c0_i32_0 = arith.constant 0 : i32
    return %arg0, %c0_i32 : i32, i32
  }
}

</mosaic_0001>

<llo_original>
// kernel: tpu_custom_call.1
$region0: #{tpu_custom_call.1}
  #allocation0 [shape = 'u32[]', space=smem, size = 0x4, offset = 0x4, fixed_abs, tag = 'smem constant byte address 0x4 - core index']
  #allocation1 [shape = 'u32[144,128]{1,0:T(1,128)}', space=vmem, size = 0x12000, scoped, tag = 'internal scratch']
  %s0 = inlined_call_operand.vmem [shape: f32[8,4], index: 0, kind: input, shape index: {}]
  %s1 = inlined_call_operand.vmem [shape: f32[4,256], index: 1, kind: input, shape index: {}]
  %s2 = inlined_call_operand.vmem [shape: f32[1,256], index: 2, kind: input, shape index: {}]
  %s3 = inlined_call_operand.hbm [shape: bf16[256,128], index: 3, kind: input, shape index: {}]
  %s4 = inlined_call_operand.vmem [shape: f32[1,128], index: 4, kind: input, shape index: {}]
  %s5 = inlined_call_operand.hbm [shape: f32[8,128], index: 5, kind: output, shape index: {}]
  %s6 = sld [smem:[#allocation0]]
  $region34: #{tpu_custom_call.1} parent=0
    _
  %s8 = ssub.s32 1, %s6
  %s9 = scalar_select 0, %s8, %s6
  $region1: #{tpu_custom_call.1} parent=0
    #allocation2 [shape = 'u8[65536]{0}', space=vmem, size = 0x10000, scoped, tag = 'input window, operand 3, single buffered']
    #allocation3 [shape = 's32[1]{0}', space=sflag, size = 0x4, scoped, tag = 'scoped memory for tpu_custom_call.1']
    #allocation4 [shape = 's32[1]{0}', space=sflag, size = 0x4, scoped, tag = 'scoped memory for tpu_custom_call.1']
    #allocation5 [shape = 'u8[4096]{0}', space=vmem, size = 0x1000, scoped, tag = 'output window, operand 0, single buffered']
    %10 = vsyncpa [#allocation3], 0
    %11 = vsyncpa [#allocation4], 0
    // Predicated region
    $region2: #{tpu_custom_call.1} parent=1 // pred_check
      _
    $region3: #{tpu_custom_call.1} parent=1 // pred_check_branch
      %13 = sbr.rel (0) target = $region5
    $region4: #{tpu_custom_call.1} parent=1 // pred_region
      _
    $region5: #{tpu_custom_call.1} parent=1 // pred_fallthru
      _
    // Predicated region
    $region6: #{tpu_custom_call.1} parent=1 // pred_check
      _
    $region7: #{tpu_custom_call.1} parent=1 // pred_check_branch
      %15 = sbr.rel (0) target = $region9
    $region8: #{tpu_custom_call.1} parent=1 // pred_region
      _
    $region9: #{tpu_custom_call.1} parent=1 // pred_fallthru
      _
    // Predicated region
    $region10: #{tpu_custom_call.1} parent=1 // pred_check
      _
    $region11: #{tpu_custom_call.1} parent=1 // pred_check_branch
      %17 = sbr.rel (0) target = $region13
    $region12: #{tpu_custom_call.1} parent=1 // pred_region
      _
    $region13: #{tpu_custom_call.1} parent=1 // pred_fallthru
      _
    // Predicated region
    $region14: #{tpu_custom_call.1} parent=1 // pred_check
      _
    $region15: #{tpu_custom_call.1} parent=1 // pred_check_branch
      %19 = sbr.rel (0) target = $region17
    $region16: #{tpu_custom_call.1} parent=1 // pred_region
      %s21 = ssub.s32 2048, 2048
      %22 = vsyncadd [#allocation3], %s21
      %s23 = sshll.u32 [#allocation2], 4
      %s24 = int_to_ptr.vmem [resolvable:$true] %s23
      %29 = dma.hbm_to_vmem [thread:$0]  %s3, 2048, %s24, [#allocation3], 64, 64, 4
    $region17: #{tpu_custom_call.1} parent=1 // pred_fallthru
      _
    // Predicated region
    $region18: #{tpu_custom_call.1} parent=1 // pred_check
      _
    $region19: #{tpu_custom_call.1} parent=1 // pred_check_branch
      %31 = sbr.rel (0) target = $region21
    $region20: #{tpu_custom_call.1} parent=1 // pred_region
      _
    $region21: #{tpu_custom_call.1} parent=1 // pred_fallthru
      _
    // Predicated region
    $region22: #{tpu_custom_call.1} parent=1 // pred_check
      _
    $region23: #{tpu_custom_call.1} parent=1 // pred_check_branch
      %33 = sbr.rel (0) target = $region25
    $region24: #{tpu_custom_call.1} parent=1 // pred_region
      %34 = dma.done [#allocation3], 2048
    $region25: #{tpu_custom_call.1} parent=1 // pred_fallthru
      _
    %v36 = vld [vmem:[%s0] sm:$0xff]
    %v37 = vld [vmem:[%s1] sm:$0xff]
    %39 = vset.pattern.permute.xlu0 0
    %40 = vperm.xlu0 %39, %v36
    %v41 = vpop.permute.xlu0 %40
    %v44 = vlaneseq
    %v45 = vshrl.u32 %v44, 7
    %v46 = vsub.s32 0, %v45
    %v47 = vrot.slane %v37, %v46
    %v48 = vlaneseq
    %v49 = vshrl.u32 %v48, 7
    %v50 = vsub.s32 4, %v49
    %v51 = vrot.slane %v37, %v50
    %v54 = vlaneseq
    %v55 = vshrl.u32 %v54, 7
    %v56 = vsub.s32 0, %v55
    %v57 = vrot.slane %v47, %v56
    %v58 = vlaneseq
    %v59 = vshrl.u32 %v58, 7
    %v60 = vsub.s32 0, %v59
    %v61 = vrot.slane %v51, %v60
    %v62 = vmul.f32 %v41, %v57
    %v63 = vmul.f32 %v41, %v61
    %64 = vset.pattern.permute.xlu0 1
    %65 = vperm.xlu0 %64, %v36
    %v66 = vpop.permute.xlu0 %65
    %v68 = vlaneseq
    %v69 = vshrl.u32 %v68, 7
    %v70 = vsub.s32 1, %v69
    %v71 = vrot.slane %v37, %v70
    %v72 = vlaneseq
    %v73 = vshrl.u32 %v72, 7
    %v74 = vsub.s32 5, %v73
    %v75 = vrot.slane %v37, %v74
    %v78 = vlaneseq
    %v79 = vshrl.u32 %v78, 7
    %v80 = vsub.s32 1, %v79
    %v81 = vrot.slane %v71, %v80
    %v82 = vlaneseq
    %v83 = vshrl.u32 %v82, 7
    %v84 = vsub.s32 1, %v83
    %v85 = vrot.slane %v75, %v84
    %v86 = vmul.f32 %v66, %v81
    %v87 = vmul.f32 %v66, %v85
    %v88 = vadd.f32 %v62, %v86
    %v89 = vadd.f32 %v63, %v87
    %90 = vset.pattern.permute.xlu0 2
    %91 = vperm.xlu0 %90, %v36
    %v92 = vpop.permute.xlu0 %91
    %v94 = vlaneseq
    %v95 = vshrl.u32 %v94, 7
    %v96 = vsub.s32 2, %v95
    %v97 = vrot.slane %v37, %v96
    %v98 = vlaneseq
    %v99 = vshrl.u32 %v98, 7
    %v100 = vsub.s32 6, %v99
    %v101 = vrot.slane %v37, %v100
    %v104 = vlaneseq
    %v105 = vshrl.u32 %v104, 7
    %v106 = vsub.s32 2, %v105
    %v107 = vrot.slane %v97, %v106
    %v108 = vlaneseq
    %v109 = vshrl.u32 %v108, 7
    %v110 = vsub.s32 2, %v109
    %v111 = vrot.slane %v101, %v110
    %v112 = vmul.f32 %v92, %v107
    %v113 = vmul.f32 %v92, %v111
    %v114 = vadd.f32 %v88, %v112
    %v115 = vadd.f32 %v89, %v113
    %116 = vset.pattern.permute.xlu0 3
    %117 = vperm.xlu0 %116, %v36
    %v118 = vpop.permute.xlu0 %117
    %v120 = vlaneseq
    %v121 = vshrl.u32 %v120, 7
    %v122 = vsub.s32 3, %v121
    %v123 = vrot.slane %v37, %v122
    %v124 = vlaneseq
    %v125 = vshrl.u32 %v124, 7
    %v126 = vsub.s32 7, %v125
    %v127 = vrot.slane %v37, %v126
    %v130 = vlaneseq
    %v131 = vshrl.u32 %v130, 7
    %v132 = vsub.s32 3, %v131
    %v133 = vrot.slane %v123, %v132
    %v134 = vlaneseq
    %v135 = vshrl.u32 %v134, 7
    %v136 = vsub.s32 3, %v135
    %v137 = vrot.slane %v127, %v136
    %v138 = vmul.f32 %v118, %v133
    %v139 = vmul.f32 %v118, %v137
    %v140 = vadd.f32 %v114, %v138
    %v141 = vadd.f32 %v115, %v139
    %v142 = vld [vmem:[%s2] sm:$0x3]
    %v144 = vlaneseq
    %v145 = vshrl.u32 %v144, 7
    %v146 = vsub.s32 0, %v145
    %v147 = vrot.slane %v142, %v146
    %v148 = vlaneseq
    %v149 = vshrl.u32 %v148, 7
    %v150 = vsub.s32 1, %v149
    %v151 = vrot.slane %v142, %v150
    %v154 = vadd.f32 %v140, %v147
    %v155 = vadd.f32 %v141, %v151
    %v156 = vmax.f32 %v154, 0.0
    %v157 = vmax.f32 %v155, 0.0
    %v158 = vpack.c.bf16 %v156, %v156
    %v159 = vpack.c.bf16 %v157, %v157
    %v160 = vld [vmem:[#allocation2] sm:$0xf]
    %v161 = vld [vmem:[#allocation2 + $0x4] sm:$0xf]
    %v162 = vld [vmem:[#allocation2 + $0x8] sm:$0xf]
    %v163 = vld [vmem:[#allocation2 + $0xc] sm:$0xf]
    %v164 = vld [vmem:[#allocation2 + $0x10] sm:$0xf]
    %v165 = vld [vmem:[#allocation2 + $0x14] sm:$0xf]
    %v166 = vld [vmem:[#allocation2 + $0x18] sm:$0xf]
    %v167 = vld [vmem:[#allocation2 + $0x1c] sm:$0xf]
    %v168 = vld [vmem:[#allocation2 + $0x20] sm:$0xf]
    %v169 = vld [vmem:[#allocation2 + $0x24] sm:$0xf]
    %v170 = vld [vmem:[#allocation2 + $0x28] sm:$0xf]
    %v171 = vld [vmem:[#allocation2 + $0x2c] sm:$0xf]
    %v172 = vld [vmem:[#allocation2 + $0x30] sm:$0xf]
    %v173 = vld [vmem:[#allocation2 + $0x34] sm:$0xf]
    %v174 = vld [vmem:[#allocation2 + $0x38] sm:$0xf]
    %v175 = vld [vmem:[#allocation2 + $0x3c] sm:$0xf]
    %v176 = vld [vmem:[#allocation2 + $0x40] sm:$0xf]
    %v177 = vld [vmem:[#allocation2 + $0x44] sm:$0xf]
    %v178 = vld [vmem:[#allocation2 + $0x48] sm:$0xf]
    %v179 = vld [vmem:[#allocation2 + $0x4c] sm:$0xf]
    %v180 = vld [vmem:[#allocation2 + $0x50] sm:$0xf]
    %v181 = vld [vmem:[#allocation2 + $0x54] sm:$0xf]
    %v182 = vld [vmem:[#allocation2 + $0x58] sm:$0xf]
    %v183 = vld [vmem:[#allocation2 + $0x5c] sm:$0xf]
    %v184 = vld [vmem:[#allocation2 + $0x60] sm:$0xf]
    %v185 = vld [vmem:[#allocation2 + $0x64] sm:$0xf]
    %v186 = vld [vmem:[#allocation2 + $0x68] sm:$0xf]
    %v187 = vld [vmem:[#allocation2 + $0x6c] sm:$0xf]
    %v188 = vld [vmem:[#allocation2 + $0x70] sm:$0xf]
    %v189 = vld [vmem:[#allocation2 + $0x74] sm:$0xf]
    %v190 = vld [vmem:[#allocation2 + $0x78] sm:$0xf]
    %v191 = vld [vmem:[#allocation2 + $0x7c] sm:$0xf]
    %v192 = vld [vmem:[%s4] sm:$0x1]
    %v194 = vlaneseq
    %v195 = vshrl.u32 %v194, 7
    %v196 = vsub.s32 0, %v195
    %v197 = vrot.slane %v192, %v196
    %v231 = vunpack.c.l.b16 %v160
    %v232 = vunpack.c.l.b16 %v161
    %v233 = vunpack.c.l.b16 %v162
    %v234 = vunpack.c.l.b16 %v163
    %v235 = vunpack.c.l.b16 %v164
    %v236 = vunpack.c.l.b16 %v165
    %v237 = vunpack.c.l.b16 %v166
    %v238 = vunpack.c.l.b16 %v167
    %v239 = vunpack.c.l.b16 %v168
    %v240 = vunpack.c.l.b16 %v169
    %v241 = vunpack.c.l.b16 %v170
    %v242 = vunpack.c.l.b16 %v171
    %v243 = vunpack.c.l.b16 %v172
    %v244 = vunpack.c.l.b16 %v173
    %v245 = vunpack.c.l.b16 %v174
    %v246 = vunpack.c.l.b16 %v175
    %v247 = vunpack.c.l.b16 %v176
    %v248 = vunpack.c.l.b16 %v177
    %v249 = vunpack.c.l.b16 %v178
    %v250 = vunpack.c.l.b16 %v179
    %v251 = vunpack.c.l.b16 %v180
    %v252 = vunpack.c.l.b16 %v181
    %v253 = vunpack.c.l.b16 %v182
    %v254 = vunpack.c.l.b16 %v183
    %v255 = vunpack.c.l.b16 %v184
    %v256 = vunpack.c.l.b16 %v185
    %v257 = vunpack.c.l.b16 %v186
    %v258 = vunpack.c.l.b16 %v187
    %v259 = vunpack.c.l.b16 %v188
    %v260 = vunpack.c.l.b16 %v189
    %v261 = vunpack.c.l.b16 %v190
    %v262 = vunpack.c.l.b16 %v191
    %v263 = vpack.c.b16 %v232, %v231
    %v264 = vpack.c.b16 %v234, %v233
    %v265 = vpack.c.b16 %v236, %v235
    %v266 = vpack.c.b16 %v238, %v237
    %v267 = vpack.c.b16 %v240, %v239
    %v268 = vpack.c.b16 %v242, %v241
    %v269 = vpack.c.b16 %v244, %v243
    %v270 = vpack.c.b16 %v246, %v245
    %v271 = vpack.c.b16 %v248, %v247
    %v272 = vpack.c.b16 %v250, %v249
    %v273 = vpack.c.b16 %v252, %v251
    %v274 = vpack.c.b16 %v254, %v253
    %v275 = vpack.c.b16 %v256, %v255
    %v276 = vpack.c.b16 %v258, %v257
    %v277 = vpack.c.b16 %v260, %v259
    %v278 = vpack.c.b16 %v262, %v261
    %295 = vmatprep.subr.bf16.mxu0 0
    %296 = vmatpush1.bf16.msra.mxu0 %v263
    %297 = vmatprep.subr.bf16.mxu0 0
    %298 = vmatpush1.bf16.msra.mxu0 %v264
    %299 = vmatprep.subr.bf16.mxu0 0
    %300 = vmatpush1.bf16.msra.mxu0 %v265
    %301 = vmatprep.subr.bf16.mxu0 0
    %302 = vmatpush1.bf16.msra.mxu0 %v266
    %303 = vmatprep.subr.bf16.mxu0 0
    %304 = vmatpush1.bf16.msra.mxu0 %v267
    %305 = vmatprep.subr.bf16.mxu0 0
    %306 = vmatpush1.bf16.msra.mxu0 %v268
    %307 = vmatprep.subr.bf16.mxu0 0
    %308 = vmatpush1.bf16.msra.mxu0 %v269
    %309 = vmatprep.subr.bf16.mxu0 0
    %310 = vmatpush1.bf16.msra.mxu0 %v270
    %311 = vmatprep.subr.bf16.mxu0 0
    %312 = vmatpush1.bf16.msra.mxu0 %v271
    %313 = vmatprep.subr.bf16.mxu0 0
    %314 = vmatpush1.bf16.msra.mxu0 %v272
    %315 = vmatprep.subr.bf16.mxu0 0
    %316 = vmatpush1.bf16.msra.mxu0 %v273
    %317 = vmatprep.subr.bf16.mxu0 0
    %318 = vmatpush1.bf16.msra.mxu0 %v274
    %319 = vmatprep.subr.bf16.mxu0 0
    %320 = vmatpush1.bf16.msra.mxu0 %v275
    %321 = vmatprep.subr.bf16.mxu0 0
    %322 = vmatpush1.bf16.msra.mxu0 %v276
    %323 = vmatprep.subr.bf16.mxu0 0
    %324 = vmatpush1.bf16.msra.mxu0 %v277
    %325 = vmatprep.subr.bf16.mxu0 0
    %326 = vmatpush1.bf16.msra.mxu0 %v278
    %327 = vmatprep.mubr.bf16.mxu0 %v159
    %328 = vmatmul.mubr.bf16.gmra.mrb[0].mxu0 %v158
    %v329 = vpop.f32.mrb[0].mxu0
    %v330 = vadd.f32 %v197, %v329
    %v331 = vpop.f32.mrb[0].mxu0
    %v332 = vpop.f32.mrb[0].mxu0
    %v333 = vpop.f32.mrb[0].mxu0
    %334 = vdwg.mxu0
    %335 = vst [vmem:[#allocation5] sm:$0xff] %v330
    // Predicated region
    $region26: #{tpu_custom_call.1} parent=1 // pred_check
      _
    $region27: #{tpu_custom_call.1} parent=1 // pred_check_branch
      %337 = sbr.rel (0) target = $region29
    $region28: #{tpu_custom_call.1} parent=1 // pred_region
      %s339 = ssub.s32 128, 128
      %340 = vsyncadd [#allocation4], %s339
      %s342 = sshll.u32 [#allocation5], 4
      %s343 = int_to_ptr.vmem [resolvable:$true] %s342
      %345 = dma.vmem_to_hbm [thread:$0]  %s343, 128, %s5, [#allocation4]
    $region29: #{tpu_custom_call.1} parent=1 // pred_fallthru
      _
    // Predicated region
    $region30: #{tpu_custom_call.1} parent=1 // pred_check
      _
    $region31: #{tpu_custom_call.1} parent=1 // pred_check_branch
      %347 = sbr.rel (0) target = $region33
    $region32: #{tpu_custom_call.1} parent=1 // pred_region
      %348 = dma.done [#allocation4], 128
    $region33: #{tpu_custom_call.1} parent=1 // pred_fallthru
      _
    %349 = vsyncpa [#allocation3], 1
    %350 = vsyncpa [#allocation4], 1

</llo_original>
